<compile_context>
chip_gen: v6e
topology: v6e:2x2x1
jax: 0.10.0
libtpu: 0.0.40
codegen_flags: <defaults>
</compile_context>

<pallas_src>
import functools

import numpy as np
import jax
import jax.numpy as jnp
from jax.experimental import pallas as pl
from jax.experimental.pallas import tpu as pltpu


@functools.lru_cache(maxsize=None)
def _dct_matrix_np(m, n):
    """DCT-II matrix, identical math to the PyTorch reference. Cached as HOST numpy only."""
    N = n
    C = np.zeros([m, n], dtype=np.float64)
    C[0, :] = np.sqrt(1.0 / N)
    i = np.arange(1, m, dtype=np.float64)[:, None]
    j = np.arange(n, dtype=np.float64)[None, :]
    C[1:, :] = np.cos(np.pi * i * (2.0 * j + 1.0) / (2.0 * N)) * np.sqrt(2.0 / N)
    return C.astype(np.float32)


def _dct1x_kernel(dct_t_ref, x_ref, o_ref):
    # dct_t_ref: (Wp, Wp) = (block-diag) dctMat.T, resident across the whole grid.
    # x_ref / o_ref: (TM, Wp) row tile.  out_tile = x_tile @ dctMat.T (f32 accumulation).
    o_ref[...] = jnp.dot(
        x_ref[...], dct_t_ref[...], preferred_element_type=jnp.float32
    ).astype(o_ref.dtype)


def _vmem_capacity_bytes():
    try:
        return int(pltpu.get_tpu_info().vmem_capacity_bytes)
    except Exception:
        return 64 << 20  # conservative: v7x per-TC physical VMEM


def _pick_row_tile(m_rows, row_bytes, vmem_cap):
    """Rows per tile: ~4 MiB per pipeline buffer (in/out double-buffered -> 4 buffers),
    capped to ~45% of VMEM across those buffers, multiple of 8, <= 8192, and small enough
    to leave >= ~4 grid steps when m_rows allows it."""
    per_buf_target = min(4 << 20, max(512 << 10, int(vmem_cap * 0.45) // 4))
    tm = (per_buf_target // row_bytes) // 8 * 8
    tm = max(8, min(tm, 8192))
    quarter = (((m_rows + 3) // 4) + 7) // 8 * 8  # round_up(cdiv(m_rows, 4), 8)
    tm = min(tm, max(8, quarter))
    return tm


def dct1x_forward(x, dim=-1):
    """Pallas equivalent of DCT1x.forward: DCT along `dim` (default: last axis)."""
    ndim = x.ndim
    axis = dim % ndim
    if axis != ndim - 1:
        # TODO(synk): a contraction-dim kernel variant would avoid these two HBM transposes.
        x = jnp.swapaxes(x, axis, -1)

    lead = x.shape[:-1]
    W = x.shape[-1]
    M = int(np.prod(lead)) if lead else 1

    mat_dtype = jnp.bfloat16 if x.dtype == jnp.bfloat16 else jnp.float32
    dct_np = _dct_matrix_np(W, W)

    # Small-W path: pack k independent rows into the lane axis -> lane-dense stores.
    k = 1
    if W < 128 and M > 1:
        k_max = max(1, 128 // W)
        for cand in range(min(k_max, M), 0, -1):
            if M % cand == 0:
                k = cand
                break

    Wp = k * W
    Mp = M // k
    if k > 1:
        mat_np = np.kron(np.eye(k, dtype=np.float32), dct_np.T)  # block-diag of dctMat.T
    else:
        mat_np = dct_np.T
    dct_t = jnp.asarray(mat_np, dtype=mat_dtype)

    x2 = x.reshape(Mp, Wp)  # contiguous re-grouping of rows; no data movement

    itemsize = np.dtype(x.dtype).itemsize
    mat_itemsize = np.dtype(mat_dtype).itemsize
    vmem_cap = _vmem_capacity_bytes()
    TM = _pick_row_tile(Mp, itemsize * Wp, vmem_cap)
    grid = (pl.cdiv(Mp, TM),)  # ragged last block is fine: rows are independent

    usage = 4 * TM * Wp * itemsize + 2 * Wp * Wp * mat_itemsize
    vmem_limit = int(min(vmem_cap, max(16 << 20, usage + (8 << 20))))

    out = pl.pallas_call(
        _dct1x_kernel,
        out_shape=jax.ShapeDtypeStruct((Mp, Wp), x.dtype),
        grid_spec=pltpu.PrefetchScalarGridSpec(
            num_scalar_prefetch=0,
            grid=grid,
            in_specs=[
                pl.BlockSpec((Wp, Wp), lambda i: (0, 0)),   # DCT matrix: resident
                pl.BlockSpec((TM, Wp), lambda i: (i, 0)),   # row tile of x
            ],
            out_specs=pl.BlockSpec((TM, Wp), lambda i: (i, 0)),
        ),
        compiler_params=pltpu.CompilerParams(
            dimension_semantics=("parallel",),
            vmem_limit_bytes=vmem_limit,
        ),
    )(dct_t, x2)

    y = out.reshape(*lead, W)
    if axis != ndim - 1:
        y = jnp.swapaxes(y, axis, -1)
    return y


if __name__ == "__main__":
    key = jax.random.PRNGKey(0)
    B, C, H, W = 2, 4, 16, 16
    x = jax.random.normal(key, (B, C, H, W), dtype=jnp.float32)

    fwd = jax.jit(dct1x_forward)
    y = jax.block_until_ready(fwd(x))

    # Reference: same math as the PyTorch module (DCT along the last axis).
    dct_mat = jnp.asarray(_dct_matrix_np(W, W))
    y_ref = jnp.einsum(
        "bchw,iw->bchi", x, dct_mat, precision=jax.lax.Precision.HIGHEST
    )
    assert y.shape == (B, C, H, W)
    assert jnp.allclose(y, y_ref, atol=2e-3, rtol=2e-3), float(
        jnp.max(jnp.abs(y - y_ref))
    )

    print("KERNEL_OK")
</pallas_src>

<mosaic_0001>
module attributes {stable_mosaic.version = 11 : i64} {
  func.func @_dct1x_kernel(%arg0: i32, %arg1: memref<128x128xf32, #tpu.memory_space<vmem>>, %arg2: memref<8x128xf32, #tpu.memory_space<vmem>>, %arg3: memref<8x128xf32, #tpu.memory_space<vmem>>) attributes {dimension_semantics = [#tpu.dimension_semantics<parallel>], iteration_bounds = array<i64: 2>, scalar_prefetch = 0 : i64, scratch_operands = 0 : i64, tpu.core_type = #tpu.core_type<tc>, window_params = [{pipeline_mode = #tpu.pipeline_mode<synchronous>, transform_indices = @transform_0, window_bounds = array<i64: 128, 128>}, {transform_indices = @transform_1, window_bounds = array<i64: 8, 128>}, {transform_indices = @transform_2, window_bounds = array<i64: 8, 128>}]} {
    %c0 = arith.constant 0 : index
    %c0_0 = arith.constant 0 : index
    %0 = vector.load %arg2[%c0, %c0_0] : memref<8x128xf32, #tpu.memory_space<vmem>>, vector<8x128xf32>
    %c0_1 = arith.constant 0 : index
    %c0_2 = arith.constant 0 : index
    %1 = vector.load %arg1[%c0_1, %c0_2] : memref<128x128xf32, #tpu.memory_space<vmem>>, vector<128x128xf32>
    %cst = arith.constant dense<0.000000e+00> : vector<8x128xf32>
    %2 = tpu.matmul %0, %1, %cst {dimension_numbers = #tpu.dot_dimension_numbers<[1], [0], [0], [1], [0, 0, 1, 1], [], []>} : vector<8x128xf32>, vector<128x128xf32>, vector<8x128xf32> -> vector<8x128xf32>
    %c0_3 = arith.constant 0 : index
    %c0_4 = arith.constant 0 : index
    %3 = vector.load %arg3[%c0_3, %c0_4] : memref<8x128xf32, #tpu.memory_space<vmem>>, vector<8x128xf32>
    tpu.vector_store %arg3[%c0_3, %c0_4], %2 {strides = array<i32>} : memref<8x128xf32, #tpu.memory_space<vmem>>, vector<8x128xf32>,
    return
  }
  func.func @transform_0(%arg0: i32) -> (i32, i32) {
    %c0_i32 = arith.constant 0 : i32
    %c0_i32_0 = arith.constant 0 : i32
    %c0_i32_1 = arith.constant 0 : i32
    return %c0_i32, %c0_i32_0 : i32, i32
  }
  func.func @transform_1(%arg0: i32) -> (i32, i32) {
    %c0_i32 = arith.constant 0 : i32
    %c0_i32_0 = arith.constant 0 : i32
    return %arg0, %c0_i32 : i32, i32
  }
  func.func @transform_2(%arg0: i32) -> (i32, i32) {
    %c0_i32 = arith.constant 0 : i32
    %c0_i32_0 = arith.constant 0 : i32
    return %arg0, %c0_i32 : i32, i32
  }
}

</mosaic_0001>

<llo_original>
// kernel: dct1x_forward.1
$region0: #{dct1x_forward.1}
  #allocation0 [shape = 'u32[]', space=smem, size = 0x4, offset = 0x4, fixed_abs, tag = 'smem constant byte address 0x4 - core index']
  #allocation1 [shape = 'u32[144,128]{1,0:T(1,128)}', space=vmem, size = 0x12000, scoped, tag = 'internal scratch']
  %s0 = inlined_call_operand.vmem [shape: f32[128,128], index: 0, kind: input, shape index: {}]
  %s1 = inlined_call_operand.vmem [shape: f32[16,128], index: 1, kind: input, shape index: {}]
  %s2 = inlined_call_operand.vmem [shape: f32[16,128], index: 2, kind: output, shape index: {}]
  %s3 = sld [smem:[#allocation0]]
  $region41: #{dct1x_forward.1} parent=0
    _
  %s5 = ssub.s32 1, %s3
  %s6 = scalar_select 0, %s5, %s3
  loop: start=0, step=1, limit=4
  $region2: #{dct1x_forward.1} parent=0 // loop_pre_header
    _
  $region3: #{dct1x_forward.1} parent=0 // loop_header
    %s8 = sphi 0, %s12
    %p9 = scmp.ge.s32.totalorder %s8, 4
    %s16 = sphi 0, %s16
    %s18 = sphi 0, %s16
    %s19 = sphi 0, %s18
    %s33 = sphi 0, %s19
    %s39 = sphi 0, %s41
    %s42 = sphi 0, %s39
    %s43 = sphi 0, %s42
    %s59 = sphi 0, %s43
    %s65 = sphi 0, %s67
    %s68 = sphi 0, %s65
    %s69 = sphi 0, %s68
    %s85 = sphi 0, %s69
  $region4: #{dct1x_forward.1} parent=0 // loop_header_branch
    %11 = sbr.rel (%p9) target = $region8
  $region5: #{dct1x_forward.1} parent=0 // loop_body
    %s13 = ssub.s32 %s8, 1
    %s14 = ssub.s32 %s8, 2
    %s15 = sadd.s32 %s8, 1
    %s17 = sadd.s32 %s16, 1
    %p20 = scmp.eq.s32.totalorder %s8, 1
    %p21 = scmp.ne.s32.totalorder %s16, %s18
    %p22 = scmp.eq.s32.totalorder %s8, 0
    %p23 = por %p21, %p22
    %p24 = scmp.ne.s32.totalorder %s16, %s18
    %p25 = scmp.eq.s32.totalorder %s13, 1
    %p26 = por %p24, %p25
    %p27 = scmp.ne.s32.totalorder %s18, %s19
    %p28 = scmp.eq.s32.totalorder %s13, 0
    %p29 = por %p27, %p28
    %p30 = scmp.ne.s32.totalorder %s18, %s19
    %p31 = scmp.eq.s32.totalorder %s14, 1
    %p32 = por %p30, %p31
    %p34 = scmp.ne.s32.totalorder %s19, %s33
    %p35 = scmp.eq.s32.totalorder %s14, 0
    %p36 = por %p34, %p35
    %s37 = ssub.s32 %s8, %s15
    %p38 = scmp.eq.s32.totalorder %s37, 0
    %s40 = sadd.s32 %s39, 1
    %s41 = scalar_select %p38, %s39, %s40
    %p44 = pneg %p38
    %p45 = scmp.eq.s32.totalorder %s8, 1
    %p46 = por %p44, %p45
    %p47 = scmp.ne.s32.totalorder %s39, %s42
    %p48 = scmp.eq.s32.totalorder %s8, 0
    %p49 = por %p47, %p48
    %p50 = scmp.ne.s32.totalorder %s39, %s42
    %p51 = scmp.eq.s32.totalorder %s13, 1
    %p52 = por %p50, %p51
    %p53 = scmp.ne.s32.totalorder %s42, %s43
    %p54 = scmp.eq.s32.totalorder %s13, 0
    %p55 = por %p53, %p54
    %p56 = scmp.ne.s32.totalorder %s42, %s43
    %p57 = scmp.eq.s32.totalorder %s14, 1
    %p58 = por %p56, %p57
    %p60 = scmp.ne.s32.totalorder %s43, %s59
    %p61 = scmp.eq.s32.totalorder %s14, 0
    %p62 = por %p60, %p61
    %s63 = ssub.s32 %s8, %s15
    %p64 = scmp.eq.s32.totalorder %s63, 0
    %s66 = sadd.s32 %s65, 1
    %s67 = scalar_select %p64, %s65, %s66
    %p70 = pneg %p64
    %p71 = scmp.eq.s32.totalorder %s8, 1
    %p72 = por %p70, %p71
    %p73 = scmp.ne.s32.totalorder %s65, %s68
    %p74 = scmp.eq.s32.totalorder %s8, 0
    %p75 = por %p73, %p74
    %p76 = scmp.ne.s32.totalorder %s65, %s68
    %p77 = scmp.eq.s32.totalorder %s13, 1
    %p78 = por %p76, %p77
    %p79 = scmp.ne.s32.totalorder %s68, %s69
    %p80 = scmp.eq.s32.totalorder %s13, 0
    %p81 = por %p79, %p80
    %p82 = scmp.ne.s32.totalorder %s68, %s69
    %p83 = scmp.eq.s32.totalorder %s14, 1
    %p84 = por %p82, %p83
    %p86 = scmp.ne.s32.totalorder %s69, %s85
    %p87 = scmp.eq.s32.totalorder %s14, 0
    %p88 = por %p86, %p87
    %p89 = scmp.le.s32.totalorder 1, %s8
    %p90 = scmp.lt.s32.totalorder %s8, 3
    %p91 = pnand %p89, %p90
    %p92 = pneg %p91
    // Predicated region
    $region9: #{dct1x_forward.1} parent=5 // pred_check
      _
    $region10: #{dct1x_forward.1} parent=5 // pred_check_branch
      %94 = sbr.rel (%p91) target = $region12
    $region11: #{dct1x_forward.1} parent=5 // pred_region
      %s95 = ssub.s32 %s8, 1
      // Predicated region
      $region13: #{dct1x_forward.1} parent=11 // pred_check
        %p96 = pneg %p29
      $region14: #{dct1x_forward.1} parent=11 // pred_check_branch
        %98 = sbr.rel (%p96) target = $region16
      $region15: #{dct1x_forward.1} parent=11 // pred_region
        _
      $region16: #{dct1x_forward.1} parent=11 // pred_fallthru
        _
    $region12: #{dct1x_forward.1} parent=5 // pred_fallthru
      _
    %p99 = scmp.lt.s32.totalorder %s8, 2
    // Predicated region
    $region17: #{dct1x_forward.1} parent=5 // pred_check
      %p100 = pneg %p99
    $region18: #{dct1x_forward.1} parent=5 // pred_check_branch
      %102 = sbr.rel (%p100) target = $region20
    $region19: #{dct1x_forward.1} parent=5 // pred_region
      // Predicated region
      $region21: #{dct1x_forward.1} parent=19 // pred_check
        %p103 = pneg %p49
      $region22: #{dct1x_forward.1} parent=19 // pred_check_branch
        %105 = sbr.rel (%p103) target = $region24
      $region23: #{dct1x_forward.1} parent=19 // pred_region
        %p106 = scmp.lt.s32.totalorder %s8, 1
        %s107 = scalar_select %p106, %s8, 1
        %s108 = smul.addr %s107, 8
        %s109 = scalar_lea.vmem %s1, %s108
      $region24: #{dct1x_forward.1} parent=19 // pred_fallthru
        _
    $region20: #{dct1x_forward.1} parent=5 // pred_fallthru
      _
    %p110 = scmp.le.s32.totalorder 1, %s8
    %p111 = scmp.lt.s32.totalorder %s8, 3
    %p112 = pnand %p110, %p111
    %p113 = pneg %p112
    // Predicated region
    $region25: #{dct1x_forward.1} parent=5 // pred_check
      _
    $region26: #{dct1x_forward.1} parent=5 // pred_check_branch
      %115 = sbr.rel (%p112) target = $region28
    $region27: #{dct1x_forward.1} parent=5 // pred_region
      %s116 = ssub.s32 %s8, 1
      %p117 = pneg %p29
      %p118 = pneg %p26
      %p119 = scmp.lt.s32.totalorder %s13, 1
      %s120 = scalar_select %p119, %s13, 1
      %s121 = smul.addr %s120, 8
      %s122 = scalar_lea.vmem %s1, %s121
      %p123 = pneg %p55
      %p124 = pneg %p52
      %p125 = pneg %p81
      %p126 = pneg %p78
      %p127 = scmp.lt.s32.totalorder %s13, 1
      %s128 = scalar_select %p127, %s13, 1
      %s129 = smul.addr %s128, 8
      %s130 = scalar_lea.vmem %s2, %s129
      %p131 = scmp.lt.s32.totalorder %s13, 1
      %s132 = scalar_select %p131, %s13, 1
      %s133 = smul.addr %s132, 8
      %s134 = scalar_lea.vmem %s1, %s133
      %p135 = scmp.lt.s32.totalorder %s13, 1
      %s136 = scalar_select %p135, %s13, 1
      %s137 = smul.addr %s136, 8
      %s138 = scalar_lea.vmem %s2, %s137
      %v139 = vld [vmem:[%s134] sm:$0xff]
      %v140 = vld [vmem:[%s0] sm:$0xff]
      %v141 = vld [vmem:[%s0 + $0x8] sm:$0xff]
      %v142 = vld [vmem:[%s0 + $0x10] sm:$0xff]
      %v143 = vld [vmem:[%s0 + $0x18] sm:$0xff]
      %v144 = vld [vmem:[%s0 + $0x20] sm:$0xff]
      %v145 = vld [vmem:[%s0 + $0x28] sm:$0xff]
      %v146 = vld [vmem:[%s0 + $0x30] sm:$0xff]
      %v147 = vld [vmem:[%s0 + $0x38] sm:$0xff]
      %v148 = vld [vmem:[%s0 + $0x40] sm:$0xff]
      %v149 = vld [vmem:[%s0 + $0x48] sm:$0xff]
      %v150 = vld [vmem:[%s0 + $0x50] sm:$0xff]
      %v151 = vld [vmem:[%s0 + $0x58] sm:$0xff]
      %v152 = vld [vmem:[%s0 + $0x60] sm:$0xff]
      %v153 = vld [vmem:[%s0 + $0x68] sm:$0xff]
      %v154 = vld [vmem:[%s0 + $0x70] sm:$0xff]
      %v155 = vld [vmem:[%s0 + $0x78] sm:$0xff]
      %156 = vmatprep.subr.mxu0 0.0
      %157 = vmatpush1.msra.mxu0 %v155
      %158 = vmatprep.subr.mxu0 0.0
      %159 = vmatpush1.msra.mxu0 %v154
      %160 = vmatprep.subr.mxu0 0.0
      %161 = vmatpush1.msra.mxu0 %v153
      %162 = vmatprep.subr.mxu0 0.0
      %163 = vmatpush1.msra.mxu0 %v152
      %164 = vmatprep.subr.mxu0 0.0
      %165 = vmatpush1.msra.mxu0 %v151
      %166 = vmatprep.subr.mxu0 0.0
      %167 = vmatpush1.msra.mxu0 %v150
      %168 = vmatprep.subr.mxu0 0.0
      %169 = vmatpush1.msra.mxu0 %v149
      %170 = vmatprep.subr.mxu0 0.0
      %171 = vmatpush1.msra.mxu0 %v148
      %172 = vmatprep.subr.mxu0 0.0
      %173 = vmatpush1.msra.mxu0 %v147
      %174 = vmatprep.subr.mxu0 0.0
      %175 = vmatpush1.msra.mxu0 %v146
      %176 = vmatprep.subr.mxu0 0.0
      %177 = vmatpush1.msra.mxu0 %v145
      %178 = vmatprep.subr.mxu0 0.0
      %179 = vmatpush1.msra.mxu0 %v144
      %180 = vmatprep.subr.mxu0 0.0
      %181 = vmatpush1.msra.mxu0 %v143
      %182 = vmatprep.subr.mxu0 0.0
      %183 = vmatpush1.msra.mxu0 %v142
      %184 = vmatprep.subr.mxu0 0.0
      %185 = vmatpush1.msra.mxu0 %v141
      %186 = vmatprep.subr.mxu0 0.0
      %187 = vmatpush1.msra.mxu0 %v140
      %188 = vmatprep.subr.mxu0 0.0
      %189 = vmatpush2.msra.mxu0 0.0
      %190 = vmatprep.subr.mxu0 0.0
      %191 = vmatpush2.msra.mxu0 0.0
      %192 = vmatprep.subr.mxu0 0.0
      %193 = vmatpush2.msra.mxu0 0.0
      %194 = vmatprep.subr.mxu0 0.0
      %195 = vmatpush2.msra.mxu0 0.0
      %196 = vmatprep.subr.mxu0 0.0
      %197 = vmatpush2.msra.mxu0 0.0
      %198 = vmatprep.subr.mxu0 0.0
      %199 = vmatpush2.msra.mxu0 0.0
      %200 = vmatprep.subr.mxu0 0.0
      %201 = vmatpush2.msra.mxu0 0.0
      %202 = vmatprep.subr.mxu0 0.0
      %203 = vmatpush2.msra.mxu0 0.0
      %204 = vmatprep.subr.mxu0 0.0
      %205 = vmatpush2.msra.mxu0 0.0
      %206 = vmatprep.subr.mxu0 0.0
      %207 = vmatpush2.msra.mxu0 0.0
      %208 = vmatprep.subr.mxu0 0.0
      %209 = vmatpush2.msra.mxu0 0.0
      %210 = vmatprep.subr.mxu0 0.0
      %211 = vmatpush2.msra.mxu0 0.0
      %212 = vmatprep.subr.mxu0 0.0
      %213 = vmatpush2.msra.mxu0 0.0
      %214 = vmatprep.subr.mxu0 0.0
      %215 = vmatpush2.msra.mxu0 0.0
      %216 = vmatprep.subr.mxu0 0.0
      %217 = vmatpush2.msra.mxu0 0.0
      %218 = vmatprep.subr.mxu0 0.0
      %219 = vmatpush2.msra.mxu0 0.0
      %220 = vmatprep.mubr.f32.mxu0 0.0
      %221 = vmatmul.mubr.f32.gmra.mxu0 %v139
      %v222 = vpop.f32.mrf.mxu0
      %v223 = vadd.f32 0.0, %v222
      %v224 = vpop.f32.mrf.mxu0
      %225 = vdwg.mxu0
      %226 = vst [vmem:[%s138] sm:$0xff] %v223
      %p227 = scmp.lt.s32.totalorder %s13, 1
      %s228 = scalar_select %p227, %s13, 1
      %s229 = smul.addr %s228, 8
      %s230 = scalar_lea.vmem %s2, %s229
      // Predicated region
      $region29: #{dct1x_forward.1} parent=27 // pred_check
        %p231 = pneg %p78
      $region30: #{dct1x_forward.1} parent=27 // pred_check_branch
        %233 = sbr.rel (%p231) target = $region32
      $region31: #{dct1x_forward.1} parent=27 // pred_region
        _
      $region32: #{dct1x_forward.1} parent=27 // pred_fallthru
        _
    $region28: #{dct1x_forward.1} parent=5 // pred_fallthru
      _
    %p234 = scmp.le.s32.totalorder 2, %s8
    // Predicated region
    $region33: #{dct1x_forward.1} parent=5 // pred_check
      %p235 = pneg %p234
    $region34: #{dct1x_forward.1} parent=5 // pred_check_branch
      %237 = sbr.rel (%p235) target = $region36
    $region35: #{dct1x_forward.1} parent=5 // pred_region
      %s238 = ssub.s32 %s8, 2
      // Predicated region
      $region37: #{dct1x_forward.1} parent=35 // pred_check
        %p239 = pneg %p84
      $region38: #{dct1x_forward.1} parent=35 // pred_check_branch
        %241 = sbr.rel (%p239) target = $region40
      $region39: #{dct1x_forward.1} parent=35 // pred_region
        %p242 = scmp.lt.s32.totalorder %s14, 1
        %s243 = scalar_select %p242, %s14, 1
        %s244 = smul.addr %s243, 8
        %s245 = scalar_lea.vmem %s2, %s244
      $region40: #{dct1x_forward.1} parent=35 // pred_fallthru
        _
    $region36: #{dct1x_forward.1} parent=5 // pred_fallthru
      _
  $region6: #{dct1x_forward.1} parent=0 // loop_footer
    %s12 = sadd.s32 1, %s8
  $region7: #{dct1x_forward.1} parent=0 // loop_footer_branch
    %7 = sbr.rel target = $region3
  $region8: #{dct1x_forward.1} parent=0 // loop_exit
    _

</llo_original>
